<compile_context>
chip_gen: v5e
topology: v5e:2x2
jax: 0.10.0
libtpu: 0.0.40
codegen_flags: <defaults>
</compile_context>

<pallas_src>
import jax
import jax.numpy as jnp
from jax.experimental import pallas as pl
from jax.experimental.pallas import tpu as pltpu


def _layernorm(h, g, b, eps=1e-5):
    mu = jnp.mean(h, axis=-1, keepdims=True)
    var = jnp.mean((h - mu) ** 2, axis=-1, keepdims=True)
    return (h - mu) * jax.lax.rsqrt(var + eps) * g + b


def glm_block_last_kernel(
    x_ref, mask_ref,
    g1_ref, b1_ref, wq_ref, wk_ref, wv_ref, wo_ref,
    g2_ref, b2_ref, w1_ref, bw1_ref, w2_ref, bw2_ref,
    gf_ref, bf_ref,
    last_h_ref,
):
    # One batch element per grid step.  x_ref block: (1, S, H) bf16.
    S = x_ref.shape[1]
    x = x_ref[0].astype(jnp.float32)                           # (S, H)

    # --- attention sub-block (K/V for all rows, everything else last row) ---
    ln1 = _layernorm(x, g1_ref[...], b1_ref[...])              # (S, H)
    ln1_bf = ln1.astype(jnp.bfloat16)

    k = jnp.dot(ln1_bf, wk_ref[...], preferred_element_type=jnp.float32)   # (S, H)
    v = jnp.dot(ln1_bf, wv_ref[...], preferred_element_type=jnp.float32)   # (S, H)

    ln1_last = ln1[S - 1:S, :].astype(jnp.bfloat16)                         # (1, H)
    q = jnp.dot(ln1_last, wq_ref[...], preferred_element_type=jnp.float32)  # (1, H), 1/sqrt(H) pre-folded

    # Last query row attends to ALL key positions under the causal mask, so
    # only the padding mask contributes an additive bias.
    scores = jnp.einsum('qd,kd->qk',
                        q.astype(jnp.bfloat16), k.astype(jnp.bfloat16),
                        preferred_element_type=jnp.float32)                 # (1, S)
    scores = scores + jnp.where(mask_ref[0] > 0.5, 0.0, -1e9)               # (1, S)
    # TODO(synk): if padding can occur at the *last* position, this yields a
    # (near-)uniform softmax row, same behaviour as the previous version.

    scores = scores - jnp.max(scores, axis=-1, keepdims=True)
    p = jnp.exp(scores)
    p = p * pl.reciprocal(jnp.sum(p, axis=-1, keepdims=True), approx=True)

    attn = jnp.dot(p.astype(jnp.bfloat16), v.astype(jnp.bfloat16),
                   preferred_element_type=jnp.float32)                      # (1, H)

    x_last = x[S - 1:S, :]                                                   # (1, H)
    h = x_last + jnp.dot(attn.astype(jnp.bfloat16), wo_ref[...],
                         preferred_element_type=jnp.float32)                 # (1, H)

    # --- MLP sub-block on the last position only ------------------------------
    ln2 = _layernorm(h, g2_ref[...], b2_ref[...])
    mlp = jnp.dot(ln2.astype(jnp.bfloat16), w1_ref[...],
                  preferred_element_type=jnp.float32) + bw1_ref[...]         # (1, F)
    # TODO(synk): PyTorch nn.GELU defaults to exact erf; tanh approximation is
    # used here for guaranteed Mosaic lowering (EUP tanh).
    mlp = jax.nn.gelu(mlp, approximate=True)
    mlp = jnp.dot(mlp.astype(jnp.bfloat16), w2_ref[...],
                  preferred_element_type=jnp.float32) + bw2_ref[...]         # (1, H)
    h = h + mlp

    # --- final LN on the last position ---------------------------------------
    last_h_ref[0] = _layernorm(h, gf_ref[...], bf_ref[...])                  # (1, H)


def lm_head_kernel(h_ref, wlm_ref, logits_ref):
    # (B, H) @ (H, TILE_V) -> (B, TILE_V); lane-dense output, f32 accumulation.
    logits_ref[...] = jnp.dot(h_ref[...].astype(jnp.bfloat16), wlm_ref[...],
                              preferred_element_type=jnp.float32)


def chatglm_filter_forward(input_ids, attention_mask, params):
    B, S = input_ids.shape
    H = params["emb"].shape[1]
    F = params["w1"].shape[1]
    V = params["wlm"].shape[1]

    # ---- host-side glue (plain JAX): embedding gather (bf16), padding mask,
    #      weight prep.
    # TODO(synk): for long S, fuse the embedding gather into kernel 1 via
    # PrefetchScalarGridSpec + per-row DMA gather instead of this HBM round trip.
    x = jnp.take(params["emb"], input_ids, axis=0).astype(jnp.bfloat16)      # (B,S,H)
    mask = attention_mask.astype(jnp.float32).reshape(B, 1, S)               # (B,1,S)

    scale = 1.0 / jnp.sqrt(jnp.float32(H))
    wq = (params["wq"] * scale).astype(jnp.bfloat16)
    wk = params["wk"].astype(jnp.bfloat16)
    wv = params["wv"].astype(jnp.bfloat16)
    wo = params["wo"].astype(jnp.bfloat16)
    w1 = params["w1"].astype(jnp.bfloat16)
    w2 = params["w2"].astype(jnp.bfloat16)
    wlm = params["wlm"].astype(jnp.bfloat16)

    def const(shape):
        n = len(shape)
        return pl.BlockSpec(shape, lambda b, _n=n: (0,) * _n)   # weights VMEM-resident

    # ---- kernel 1: fused block, grid over batch (parallel => 2 TCs on v7x) ----
    # TODO(synk): at real GLM dims (H~4k, F~16k) tile the MLP over F and stream
    # K/V flash-style to stay inside v7x's 64 MiB VMEM.
    last_h = pl.pallas_call(
        glm_block_last_kernel,
        out_shape=jax.ShapeDtypeStruct((B, 1, H), jnp.float32),
        grid=(B,),
        in_specs=[
            pl.BlockSpec((1, S, H), lambda b: (b, 0, 0)),   # x (bf16)
            pl.BlockSpec((1, 1, S), lambda b: (b, 0, 0)),   # padding mask
            const((1, H)), const((1, H)),                   # ln1 gamma, beta
            const((H, H)), const((H, H)), const((H, H)),    # Wq (scaled), Wk, Wv
            const((H, H)),                                  # Wo
            const((1, H)), const((1, H)),                   # ln2 gamma, beta
            const((H, F)), const((1, F)),                   # W1, b1
            const((F, H)), const((1, H)),                   # W2, b2
            const((1, H)), const((1, H)),                   # final LN gamma, beta
        ],
        out_specs=pl.BlockSpec((1, 1, H), lambda b: (b, 0, 0)),
        compiler_params=pltpu.CompilerParams(
            dimension_semantics=("parallel",),
            vmem_limit_bytes=64 * 1024 * 1024,
        ),
    )(
        x, mask,
        params["g1"], params["b1"], wq, wk, wv, wo,
        params["g2"], params["b2"],
        w1, params["bw1"], w2, params["bw2"],
        params["gf"], params["bf"],
    )
    last_h = last_h.reshape(B, H)                                            # (B, H) f32

    # ---- kernel 2: V-tiled LM head, (B, H) @ (H, V_pad) ----
    V_pad = ((V + 127) // 128) * 128
    if V_pad != V:
        wlm = jnp.pad(wlm, ((0, 0), (0, V_pad - V)))

    # Largest lane-aligned tile whose wlm block stays <= ~4 MiB (keeps the
    # double-buffered stream comfortably inside VMEM on v5e/v6e/v7x).
    TILE_V = 128
    for cand in (4096, 2048, 1024, 512, 256, 128):
        if V_pad % cand == 0 and H * cand * 2 <= 4 * 1024 * 1024:
            TILE_V = cand
            break
    n_tiles = V_pad // TILE_V

    wlm_kwargs = {}
    if n_tiles >= 3:
        wlm_kwargs["pipeline_mode"] = pl.Buffered(3)   # deeper weight prefetch
    wlm_spec = pl.BlockSpec((H, TILE_V), lambda v: (0, v), **wlm_kwargs)

    cost = pl.CostEstimate(
        flops=2 * B * H * V_pad,
        transcendentals=0,
        bytes_accessed=B * H * 4 + H * V_pad * 2 + B * V_pad * 4,
    )

    logits = pl.pallas_call(
        lm_head_kernel,
        out_shape=jax.ShapeDtypeStruct((B, V_pad), jnp.float32),
        grid=(n_tiles,),
        in_specs=[
            pl.BlockSpec((B, H), lambda v: (0, 0)),
            wlm_spec,
        ],
        out_specs=pl.BlockSpec((B, TILE_V), lambda v: (0, v)),
        compiler_params=pltpu.CompilerParams(
            dimension_semantics=("parallel",),
            vmem_limit_bytes=64 * 1024 * 1024,
        ),
        cost_estimate=cost,
    )(last_h, wlm)

    if V_pad != V:
        logits = logits[:, :V]

    # value = logits[:, -1]  -> shape (B, V)
    return logits


def make_params(key, vocab, hidden, ffn):
    ks = jax.random.split(key, 9)
    s_emb = 0.02
    s_h = hidden ** -0.5
    s_f = ffn ** -0.5
    return {
        "emb": jax.random.normal(ks[0], (vocab, hidden), jnp.float32) * s_emb,
        "g1": jnp.ones((1, hidden), jnp.float32),
        "b1": jnp.zeros((1, hidden), jnp.float32),
        "wq": jax.random.normal(ks[1], (hidden, hidden), jnp.float32) * s_h,
        "wk": jax.random.normal(ks[2], (hidden, hidden), jnp.float32) * s_h,
        "wv": jax.random.normal(ks[3], (hidden, hidden), jnp.float32) * s_h,
        "wo": jax.random.normal(ks[4], (hidden, hidden), jnp.float32) * s_h,
        "g2": jnp.ones((1, hidden), jnp.float32),
        "b2": jnp.zeros((1, hidden), jnp.float32),
        "w1": jax.random.normal(ks[5], (hidden, ffn), jnp.float32) * s_h,
        "bw1": jnp.zeros((1, ffn), jnp.float32),
        "w2": jax.random.normal(ks[6], (ffn, hidden), jnp.float32) * s_f,
        "bw2": jnp.zeros((1, hidden), jnp.float32),
        "gf": jnp.ones((1, hidden), jnp.float32),
        "bf": jnp.zeros((1, hidden), jnp.float32),
        "wlm": jax.random.normal(ks[7], (hidden, vocab), jnp.float32) * s_h,
    }


if __name__ == "__main__":
    B, S, H, F, V = 2, 8, 32, 128, 128

    key = jax.random.PRNGKey(0)
    k_tok, k_par = jax.random.split(key)

    input_ids = jax.random.randint(k_tok, (B, S), 0, V, dtype=jnp.int32)
    attention_mask = jnp.ones((B, S), jnp.int32).at[1, 0].set(0)  # one padded token

    params = make_params(k_par, V, H, F)

    value = chatglm_filter_forward(input_ids, attention_mask, params)
    value = jax.block_until_ready(value)
    assert value.shape == (B, V) and value.dtype == jnp.float32
    assert bool(jnp.all(jnp.isfinite(value)))
    print("KERNEL_OK")
</pallas_src>

<mosaic_0001>
module attributes {stable_mosaic.version = 11 : i64} {
  func.func @glm_block_last_kernel(%arg0: i32, %arg1: memref<1x8x32xbf16, #tpu.memory_space<vmem>>, %arg2: memref<1x1x8xf32, #tpu.memory_space<vmem>>, %arg3: memref<1x32xf32, #tpu.memory_space<vmem>>, %arg4: memref<1x32xf32, #tpu.memory_space<vmem>>, %arg5: memref<32x32xbf16, #tpu.memory_space<vmem>>, %arg6: memref<32x32xbf16, #tpu.memory_space<vmem>>, %arg7: memref<32x32xbf16, #tpu.memory_space<vmem>>, %arg8: memref<32x32xbf16, #tpu.memory_space<vmem>>, %arg9: memref<1x32xf32, #tpu.memory_space<vmem>>, %arg10: memref<1x32xf32, #tpu.memory_space<vmem>>, %arg11: memref<32x128xbf16, #tpu.memory_space<vmem>>, %arg12: memref<1x128xf32, #tpu.memory_space<vmem>>, %arg13: memref<128x32xbf16, #tpu.memory_space<vmem>>, %arg14: memref<1x32xf32, #tpu.memory_space<vmem>>, %arg15: memref<1x32xf32, #tpu.memory_space<vmem>>, %arg16: memref<1x32xf32, #tpu.memory_space<vmem>>, %arg17: memref<1x1x32xf32, #tpu.memory_space<vmem>>) attributes {dimension_semantics = [#tpu.dimension_semantics<parallel>], iteration_bounds = array<i64: 2>, scalar_prefetch = 0 : i64, scratch_operands = 0 : i64, tpu.core_type = #tpu.core_type<tc>, window_params = [{transform_indices = @transform_0, window_bounds = array<i64: 1, 8, 32>}, {transform_indices = @transform_1, window_bounds = array<i64: 1, 1, 8>}, {pipeline_mode = #tpu.pipeline_mode<synchronous>, transform_indices = @transform_2, window_bounds = array<i64: 1, 32>}, {pipeline_mode = #tpu.pipeline_mode<synchronous>, transform_indices = @transform_3, window_bounds = array<i64: 1, 32>}, {pipeline_mode = #tpu.pipeline_mode<synchronous>, transform_indices = @transform_4, window_bounds = array<i64: 32, 32>}, {pipeline_mode = #tpu.pipeline_mode<synchronous>, transform_indices = @transform_5, window_bounds = array<i64: 32, 32>}, {pipeline_mode = #tpu.pipeline_mode<synchronous>, transform_indices = @transform_6, window_bounds = array<i64: 32, 32>}, {pipeline_mode = #tpu.pipeline_mode<synchronous>, transform_indices = @transform_7, window_bounds = array<i64: 32, 32>}, {pipeline_mode = #tpu.pipeline_mode<synchronous>, transform_indices = @transform_8, window_bounds = array<i64: 1, 32>}, {pipeline_mode = #tpu.pipeline_mode<synchronous>, transform_indices = @transform_9, window_bounds = array<i64: 1, 32>}, {pipeline_mode = #tpu.pipeline_mode<synchronous>, transform_indices = @transform_10, window_bounds = array<i64: 32, 128>}, {pipeline_mode = #tpu.pipeline_mode<synchronous>, transform_indices = @transform_11, window_bounds = array<i64: 1, 128>}, {pipeline_mode = #tpu.pipeline_mode<synchronous>, transform_indices = @transform_12, window_bounds = array<i64: 128, 32>}, {pipeline_mode = #tpu.pipeline_mode<synchronous>, transform_indices = @transform_13, window_bounds = array<i64: 1, 32>}, {pipeline_mode = #tpu.pipeline_mode<synchronous>, transform_indices = @transform_14, window_bounds = array<i64: 1, 32>}, {pipeline_mode = #tpu.pipeline_mode<synchronous>, transform_indices = @transform_15, window_bounds = array<i64: 1, 32>}, {transform_indices = @transform_16, window_bounds = array<i64: 1, 1, 32>}]} {
    %c0 = arith.constant 0 : index
    %c0_0 = arith.constant 0 : index
    %c0_1 = arith.constant 0 : index
    %0 = vector.load %arg1[%c0, %c0_0, %c0_1] : memref<1x8x32xbf16, #tpu.memory_space<vmem>>, vector<1x8x32xbf16>
    %1 = vector.shape_cast %0 : vector<1x8x32xbf16> to vector<8x32xbf16>
    %2 = arith.extf %1 : vector<8x32xbf16> to vector<8x32xf32>
    %c0_2 = arith.constant 0 : index
    %c0_3 = arith.constant 0 : index
    %3 = vector.load %arg3[%c0_2, %c0_3] : memref<1x32xf32, #tpu.memory_space<vmem>>, vector<1x32xf32>
    %c0_4 = arith.constant 0 : index
    %c0_5 = arith.constant 0 : index
    %4 = vector.load %arg4[%c0_4, %c0_5] : memref<1x32xf32, #tpu.memory_space<vmem>>, vector<1x32xf32>
    %cst = arith.constant dense<0.000000e+00> : vector<8xf32>
    %5 = vector.multi_reduction <add>, %2, %cst [1] : vector<8x32xf32> to vector<8xf32>
    %6 = vector.shape_cast %5 : vector<8xf32> to vector<8x1xf32>
    %cst_6 = arith.constant 3.200000e+01 : f32
    %7 = vector.broadcast %cst_6 : f32 to vector<8x1xf32>
    %8 = arith.divf %6, %7 : vector<8x1xf32>
    %9 = vector.broadcast %8 : vector<8x1xf32> to vector<8x32xf32>
    %10 = arith.subf %2, %9 : vector<8x32xf32>
    %11 = arith.mulf %10, %10 : vector<8x32xf32>
    %cst_7 = arith.constant dense<0.000000e+00> : vector<8xf32>
    %12 = vector.multi_reduction <add>, %11, %cst_7 [1] : vector<8x32xf32> to vector<8xf32>
    %13 = vector.shape_cast %12 : vector<8xf32> to vector<8x1xf32>
    %cst_8 = arith.constant 3.200000e+01 : f32
    %14 = vector.broadcast %cst_8 : f32 to vector<8x1xf32>
    %15 = arith.divf %13, %14 : vector<8x1xf32>
    %16 = vector.broadcast %8 : vector<8x1xf32> to vector<8x32xf32>
    %17 = arith.subf %2, %16 : vector<8x32xf32>
    %cst_9 = arith.constant 9.99999974E-6 : f32
    %18 = vector.broadcast %cst_9 : f32 to vector<8x1xf32>
    %19 = arith.addf %15, %18 : vector<8x1xf32>
    %20 = math.rsqrt %19 : vector<8x1xf32>
    %21 = vector.broadcast %20 : vector<8x1xf32> to vector<8x32xf32>
    %22 = arith.mulf %17, %21 : vector<8x32xf32>
    %23 = vector.broadcast %3 : vector<1x32xf32> to vector<8x32xf32>
    %24 = arith.mulf %22, %23 : vector<8x32xf32>
    %25 = vector.broadcast %4 : vector<1x32xf32> to vector<8x32xf32>
    %26 = arith.addf %24, %25 : vector<8x32xf32>
    %27 = arith.truncf %26 : vector<8x32xf32> to vector<8x32xbf16>
    %c0_10 = arith.constant 0 : index
    %c0_11 = arith.constant 0 : index
    %28 = vector.load %arg6[%c0_10, %c0_11] : memref<32x32xbf16, #tpu.memory_space<vmem>>, vector<32x32xbf16>
    %cst_12 = arith.constant dense<0.000000e+00> : vector<8x32xf32>
    %29 = tpu.matmul %27, %28, %cst_12 {dimension_numbers = #tpu.dot_dimension_numbers<[1], [0], [0], [1], [0, 0, 1, 1], [], []>} : vector<8x32xbf16>, vector<32x32xbf16>, vector<8x32xf32> -> vector<8x32xf32>
    %c0_13 = arith.constant 0 : index
    %c0_14 = arith.constant 0 : index
    %30 = vector.load %arg7[%c0_13, %c0_14] : memref<32x32xbf16, #tpu.memory_space<vmem>>, vector<32x32xbf16>
    %cst_15 = arith.constant dense<0.000000e+00> : vector<8x32xf32>
    %31 = tpu.matmul %27, %30, %cst_15 {dimension_numbers = #tpu.dot_dimension_numbers<[1], [0], [0], [1], [0, 0, 1, 1], [], []>} : vector<8x32xbf16>, vector<32x32xbf16>, vector<8x32xf32> -> vector<8x32xf32>
    %32 = vector.extract_strided_slice %26 {offsets = [7, 0], sizes = [1, 32], strides = [1, 1]} : vector<8x32xf32> to vector<1x32xf32>
    %33 = arith.truncf %32 : vector<1x32xf32> to vector<1x32xbf16>
    %c0_16 = arith.constant 0 : index
    %c0_17 = arith.constant 0 : index
    %34 = vector.load %arg5[%c0_16, %c0_17] : memref<32x32xbf16, #tpu.memory_space<vmem>>, vector<32x32xbf16>
    %cst_18 = arith.constant dense<0.000000e+00> : vector<1x32xf32>
    %35 = tpu.matmul %33, %34, %cst_18 {dimension_numbers = #tpu.dot_dimension_numbers<[1], [0], [0], [1], [0, 0, 1, 1], [], []>} : vector<1x32xbf16>, vector<32x32xbf16>, vector<1x32xf32> -> vector<1x32xf32>
    %36 = arith.truncf %35 : vector<1x32xf32> to vector<1x32xbf16>
    %37 = arith.truncf %29 : vector<8x32xf32> to vector<8x32xbf16>
    "tpu.trace_start"() <{level = 10 : i32, message = "qd,kd->qk"}> : () -> ()
    %cst_19 = arith.constant dense<0.000000e+00> : vector<1x8xf32>
    %38 = tpu.matmul %36, %37, %cst_19 {dimension_numbers = #tpu.dot_dimension_numbers<[1], [1], [0], [0], [0, 0, 1, 0], [], []>} : vector<1x32xbf16>, vector<8x32xbf16>, vector<1x8xf32> -> vector<1x8xf32>
    "tpu.trace_stop"() : () -> ()
    %c0_20 = arith.constant 0 : index
    %c0_21 = arith.constant 0 : index
    %c0_22 = arith.constant 0 : index
    %39 = vector.load %arg2[%c0_20, %c0_21, %c0_22] : memref<1x1x8xf32, #tpu.memory_space<vmem>>, vector<1x1x8xf32>
    %40 = vector.shape_cast %39 : vector<1x1x8xf32> to vector<1x8xf32>
    %cst_23 = arith.constant 5.000000e-01 : f32
    %41 = vector.broadcast %cst_23 : f32 to vector<1x8xf32>
    %42 = arith.cmpf ogt, %40, %41 : vector<1x8xf32>
    %cst_24 = arith.constant 0.000000e+00 : f32
    %cst_25 = arith.constant -1.000000e+09 : f32
    %43 = vector.broadcast %cst_24 : f32 to vector<1x8xf32>
    %44 = vector.broadcast %cst_25 : f32 to vector<1x8xf32>
    %45 = arith.select %42, %43, %44 : vector<1x8xi1>, vector<1x8xf32>
    %46 = arith.addf %38, %45 : vector<1x8xf32>
    %cst_26 = arith.constant dense<0xFF800000> : vector<1xf32>
    %47 = vector.multi_reduction <maximumf>, %46, %cst_26 [1] : vector<1x8xf32> to vector<1xf32>
    %48 = vector.shape_cast %47 : vector<1xf32> to vector<1x1xf32>
    %49 = vector.broadcast %48 : vector<1x1xf32> to vector<1x8xf32>
    %50 = arith.subf %46, %49 : vector<1x8xf32>
    %51 = math.exp %50 : vector<1x8xf32>
    %cst_27 = arith.constant dense<0.000000e+00> : vector<1xf32>
    %52 = vector.multi_reduction <add>, %51, %cst_27 [1] : vector<1x8xf32> to vector<1xf32>
    %53 = vector.shape_cast %52 : vector<1xf32> to vector<1x1xf32>
    %54 = tpu.reciprocal %53 {approx = true} : vector<1x1xf32> -> vector<1x1xf32>
    %55 = vector.broadcast %54 : vector<1x1xf32> to vector<1x8xf32>
    %56 = arith.mulf %51, %55 : vector<1x8xf32>
    %57 = arith.truncf %56 : vector<1x8xf32> to vector<1x8xbf16>
    %58 = arith.truncf %31 : vector<8x32xf32> to vector<8x32xbf16>
    %cst_28 = arith.constant dense<0.000000e+00> : vector<1x32xf32>
    %59 = tpu.matmul %57, %58, %cst_28 {dimension_numbers = #tpu.dot_dimension_numbers<[1], [0], [0], [1], [0, 0, 1, 1], [], []>} : vector<1x8xbf16>, vector<8x32xbf16>, vector<1x32xf32> -> vector<1x32xf32>
    %60 = vector.extract_strided_slice %2 {offsets = [7, 0], sizes = [1, 32], strides = [1, 1]} : vector<8x32xf32> to vector<1x32xf32>
    %61 = arith.truncf %59 : vector<1x32xf32> to vector<1x32xbf16>
    %c0_29 = arith.constant 0 : index
    %c0_30 = arith.constant 0 : index
    %62 = vector.load %arg8[%c0_29, %c0_30] : memref<32x32xbf16, #tpu.memory_space<vmem>>, vector<32x32xbf16>
    %cst_31 = arith.constant dense<0.000000e+00> : vector<1x32xf32>
    %63 = tpu.matmul %61, %62, %cst_31 {dimension_numbers = #tpu.dot_dimension_numbers<[1], [0], [0], [1], [0, 0, 1, 1], [], []>} : vector<1x32xbf16>, vector<32x32xbf16>, vector<1x32xf32> -> vector<1x32xf32>
    %64 = arith.addf %60, %63 : vector<1x32xf32>
    %c0_32 = arith.constant 0 : index
    %c0_33 = arith.constant 0 : index
    %65 = vector.load %arg9[%c0_32, %c0_33] : memref<1x32xf32, #tpu.memory_space<vmem>>, vector<1x32xf32>
    %c0_34 = arith.constant 0 : index
    %c0_35 = arith.constant 0 : index
    %66 = vector.load %arg10[%c0_34, %c0_35] : memref<1x32xf32, #tpu.memory_space<vmem>>, vector<1x32xf32>
    %cst_36 = arith.constant dense<0.000000e+00> : vector<1xf32>
    %67 = vector.multi_reduction <add>, %64, %cst_36 [1] : vector<1x32xf32> to vector<1xf32>
    %68 = vector.shape_cast %67 : vector<1xf32> to vector<1x1xf32>
    %cst_37 = arith.constant 3.200000e+01 : f32
    %69 = vector.broadcast %cst_37 : f32 to vector<1x1xf32>
    %70 = arith.divf %68, %69 : vector<1x1xf32>
    %71 = vector.broadcast %70 : vector<1x1xf32> to vector<1x32xf32>
    %72 = arith.subf %64, %71 : vector<1x32xf32>
    %73 = arith.mulf %72, %72 : vector<1x32xf32>
    %cst_38 = arith.constant dense<0.000000e+00> : vector<1xf32>
    %74 = vector.multi_reduction <add>, %73, %cst_38 [1] : vector<1x32xf32> to vector<1xf32>
    %75 = vector.shape_cast %74 : vector<1xf32> to vector<1x1xf32>
    %cst_39 = arith.constant 3.200000e+01 : f32
    %76 = vector.broadcast %cst_39 : f32 to vector<1x1xf32>
    %77 = arith.divf %75, %76 : vector<1x1xf32>
    %78 = vector.broadcast %70 : vector<1x1xf32> to vector<1x32xf32>
    %79 = arith.subf %64, %78 : vector<1x32xf32>
    %cst_40 = arith.constant 9.99999974E-6 : f32
    %80 = vector.broadcast %cst_40 : f32 to vector<1x1xf32>
    %81 = arith.addf %77, %80 : vector<1x1xf32>
    %82 = math.rsqrt %81 : vector<1x1xf32>
    %83 = vector.broadcast %82 : vector<1x1xf32> to vector<1x32xf32>
    %84 = arith.mulf %79, %83 : vector<1x32xf32>
    %85 = arith.mulf %84, %65 : vector<1x32xf32>
    %86 = arith.addf %85, %66 : vector<1x32xf32>
    %87 = arith.truncf %86 : vector<1x32xf32> to vector<1x32xbf16>
    %c0_41 = arith.constant 0 : index
    %c0_42 = arith.constant 0 : index
    %88 = vector.load %arg11[%c0_41, %c0_42] : memref<32x128xbf16, #tpu.memory_space<vmem>>, vector<32x128xbf16>
    %cst_43 = arith.constant dense<0.000000e+00> : vector<1x128xf32>
    %89 = tpu.matmul %87, %88, %cst_43 {dimension_numbers = #tpu.dot_dimension_numbers<[1], [0], [0], [1], [0, 0, 1, 1], [], []>} : vector<1x32xbf16>, vector<32x128xbf16>, vector<1x128xf32> -> vector<1x128xf32>
    %c0_44 = arith.constant 0 : index
    %c0_45 = arith.constant 0 : index
    %90 = vector.load %arg12[%c0_44, %c0_45] : memref<1x128xf32, #tpu.memory_space<vmem>>, vector<1x128xf32>
    %91 = arith.addf %89, %90 : vector<1x128xf32>
    %92 = arith.mulf %91, %91 : vector<1x128xf32>
    %93 = arith.mulf %91, %92 : vector<1x128xf32>
    %cst_46 = arith.constant 4.471500e-02 : f32
    %94 = vector.broadcast %cst_46 : f32 to vector<1x128xf32>
    %95 = arith.mulf %94, %93 : vector<1x128xf32>
    %96 = arith.addf %91, %95 : vector<1x128xf32>
    %cst_47 = arith.constant 0.797884583 : f32
    %97 = vector.broadcast %cst_47 : f32 to vector<1x128xf32>
    %98 = arith.mulf %97, %96 : vector<1x128xf32>
    %99 = math.tanh %98 : vector<1x128xf32>
    %cst_48 = arith.constant 1.000000e+00 : f32
    %100 = vector.broadcast %cst_48 : f32 to vector<1x128xf32>
    %101 = arith.addf %100, %99 : vector<1x128xf32>
    %cst_49 = arith.constant 5.000000e-01 : f32
    %102 = vector.broadcast %cst_49 : f32 to vector<1x128xf32>
    %103 = arith.mulf %102, %101 : vector<1x128xf32>
    %104 = arith.mulf %91, %103 : vector<1x128xf32>
    %105 = arith.truncf %104 : vector<1x128xf32> to vector<1x128xbf16>
    %c0_50 = arith.constant 0 : index
    %c0_51 = arith.constant 0 : index
    %106 = vector.load %arg13[%c0_50, %c0_51] : memref<128x32xbf16, #tpu.memory_space<vmem>>, vector<128x32xbf16>
    %cst_52 = arith.constant dense<0.000000e+00> : vector<1x32xf32>
    %107 = tpu.matmul %105, %106, %cst_52 {dimension_numbers = #tpu.dot_dimension_numbers<[1], [0], [0], [1], [0, 0, 1, 1], [], []>} : vector<1x128xbf16>, vector<128x32xbf16>, vector<1x32xf32> -> vector<1x32xf32>
    %c0_53 = arith.constant 0 : index
    %c0_54 = arith.constant 0 : index
    %108 = vector.load %arg14[%c0_53, %c0_54] : memref<1x32xf32, #tpu.memory_space<vmem>>, vector<1x32xf32>
    %109 = arith.addf %107, %108 : vector<1x32xf32>
    %110 = arith.addf %64, %109 : vector<1x32xf32>
    %c0_55 = arith.constant 0 : index
    %c0_56 = arith.constant 0 : index
    %111 = vector.load %arg15[%c0_55, %c0_56] : memref<1x32xf32, #tpu.memory_space<vmem>>, vector<1x32xf32>
    %c0_57 = arith.constant 0 : index
    %c0_58 = arith.constant 0 : index
    %112 = vector.load %arg16[%c0_57, %c0_58] : memref<1x32xf32, #tpu.memory_space<vmem>>, vector<1x32xf32>
    %cst_59 = arith.constant dense<0.000000e+00> : vector<1xf32>
    %113 = vector.multi_reduction <add>, %110, %cst_59 [1] : vector<1x32xf32> to vector<1xf32>
    %114 = vector.shape_cast %113 : vector<1xf32> to vector<1x1xf32>
    %cst_60 = arith.constant 3.200000e+01 : f32
    %115 = vector.broadcast %cst_60 : f32 to vector<1x1xf32>
    %116 = arith.divf %114, %115 : vector<1x1xf32>
    %117 = vector.broadcast %116 : vector<1x1xf32> to vector<1x32xf32>
    %118 = arith.subf %110, %117 : vector<1x32xf32>
    %119 = arith.mulf %118, %118 : vector<1x32xf32>
    %cst_61 = arith.constant dense<0.000000e+00> : vector<1xf32>
    %120 = vector.multi_reduction <add>, %119, %cst_61 [1] : vector<1x32xf32> to vector<1xf32>
    %121 = vector.shape_cast %120 : vector<1xf32> to vector<1x1xf32>
    %cst_62 = arith.constant 3.200000e+01 : f32
    %122 = vector.broadcast %cst_62 : f32 to vector<1x1xf32>
    %123 = arith.divf %121, %122 : vector<1x1xf32>
    %124 = vector.broadcast %116 : vector<1x1xf32> to vector<1x32xf32>
    %125 = arith.subf %110, %124 : vector<1x32xf32>
    %cst_63 = arith.constant 9.99999974E-6 : f32
    %126 = vector.broadcast %cst_63 : f32 to vector<1x1xf32>
    %127 = arith.addf %123, %126 : vector<1x1xf32>
    %128 = math.rsqrt %127 : vector<1x1xf32>
    %129 = vector.broadcast %128 : vector<1x1xf32> to vector<1x32xf32>
    %130 = arith.mulf %125, %129 : vector<1x32xf32>
    %131 = arith.mulf %130, %111 : vector<1x32xf32>
    %132 = arith.addf %131, %112 : vector<1x32xf32>
    %c0_64 = arith.constant 0 : index
    %c0_65 = arith.constant 0 : index
    %c0_66 = arith.constant 0 : index
    %133 = vector.load %arg17[%c0_64, %c0_65, %c0_66] : memref<1x1x32xf32, #tpu.memory_space<vmem>>, vector<1x1x32xf32>
    %134 = vector.shape_cast %133 : vector<1x1x32xf32> to vector<1x32xf32>
    %135 = vector.shape_cast %132 : vector<1x32xf32> to vector<1x1x32xf32>
    tpu.vector_store %arg17[%c0_64, %c0_65, %c0_66], %135 {strides = array<i32>} : memref<1x1x32xf32, #tpu.memory_space<vmem>>, vector<1x1x32xf32>,
    return
  }
  func.func @transform_0(%arg0: i32) -> (i32, i32, i32) {
    %c0_i32 = arith.constant 0 : i32
    %c0_i32_0 = arith.constant 0 : i32
    %c0_i32_1 = arith.constant 0 : i32
    return %arg0, %c0_i32, %c0_i32_0 : i32, i32, i32
  }
  func.func @transform_1(%arg0: i32) -> (i32, i32, i32) {
    %c0_i32 = arith.constant 0 : i32
    %c0_i32_0 = arith.constant 0 : i32
    %c0_i32_1 = arith.constant 0 : i32
    return %arg0, %c0_i32, %c0_i32_0 : i32, i32, i32
  }
  func.func @transform_2(%arg0: i32) -> (i32, i32) {
    %c0_i32 = arith.constant 0 : i32
    %c0_i32_0 = arith.constant 0 : i32
    %c0_i32_1 = arith.constant 0 : i32
    return %c0_i32, %c0_i32_0 : i32, i32
  }
  func.func @transform_3(%arg0: i32) -> (i32, i32) {
    %c0_i32 = arith.constant 0 : i32
    %c0_i32_0 = arith.constant 0 : i32
    %c0_i32_1 = arith.constant 0 : i32
    return %c0_i32, %c0_i32_0 : i32, i32
  }
  func.func @transform_4(%arg0: i32) -> (i32, i32) {
    %c0_i32 = arith.constant 0 : i32
    %c0_i32_0 = arith.constant 0 : i32
    %c0_i32_1 = arith.constant 0 : i32
    return %c0_i32, %c0_i32_0 : i32, i32
  }
  func.func @transform_5(%arg0: i32) -> (i32, i32) {
    %c0_i32 = arith.constant 0 : i32
    %c0_i32_0 = arith.constant 0 : i32
    %c0_i32_1 = arith.constant 0 : i32
    return %c0_i32, %c0_i32_0 : i32, i32
  }
  func.func @transform_6(%arg0: i32) -> (i32, i32) {
    %c0_i32 = arith.constant 0 : i32
    %c0_i32_0 = arith.constant 0 : i32
    %c0_i32_1 = arith.constant 0 : i32
    return %c0_i32, %c0_i32_0 : i32, i32
  }
  func.func @transform_7(%arg0: i32) -> (i32, i32) {
    %c0_i32 = arith.constant 0 : i32
    %c0_i32_0 = arith.constant 0 : i32
    %c0_i32_1 = arith.constant 0 : i32
    return %c0_i32, %c0_i32_0 : i32, i32
  }
  func.func @transform_8(%arg0: i32) -> (i32, i32) {
    %c0_i32 = arith.constant 0 : i32
    %c0_i32_0 = arith.constant 0 : i32
    %c0_i32_1 = arith.constant 0 : i32
    return %c0_i32, %c0_i32_0 : i32, i32
  }
  func.func @transform_9(%arg0: i32) -> (i32, i32) {
    %c0_i32 = arith.constant 0 : i32
    %c0_i32_0 = arith.constant 0 : i32
    %c0_i32_1 = arith.constant 0 : i32
    return %c0_i32, %c0_i32_0 : i32, i32
  }
  func.func @transform_10(%arg0: i32) -> (i32, i32) {
    %c0_i32 = arith.constant 0 : i32
    %c0_i32_0 = arith.constant 0 : i32
    %c0_i32_1 = arith.constant 0 : i32
    return %c0_i32, %c0_i32_0 : i32, i32
  }
  func.func @transform_11(%arg0: i32) -> (i32, i32) {
    %c0_i32 = arith.constant 0 : i32
    %c0_i32_0 = arith.constant 0 : i32
    %c0_i32_1 = arith.constant 0 : i32
    return %c0_i32, %c0_i32_0 : i32, i32
  }
  func.func @transform_12(%arg0: i32) -> (i32, i32) {
    %c0_i32 = arith.constant 0 : i32
    %c0_i32_0 = arith.constant 0 : i32
    %c0_i32_1 = arith.constant 0 : i32
    return %c0_i32, %c0_i32_0 : i32, i32
  }
  func.func @transform_13(%arg0: i32) -> (i32, i32) {
    %c0_i32 = arith.constant 0 : i32
    %c0_i32_0 = arith.constant 0 : i32
    %c0_i32_1 = arith.constant 0 : i32
    return %c0_i32, %c0_i32_0 : i32, i32
  }
  func.func @transform_14(%arg0: i32) -> (i32, i32) {
    %c0_i32 = arith.constant 0 : i32
    %c0_i32_0 = arith.constant 0 : i32
    %c0_i32_1 = arith.constant 0 : i32
    return %c0_i32, %c0_i32_0 : i32, i32
  }
  func.func @transform_15(%arg0: i32) -> (i32, i32) {
    %c0_i32 = arith.constant 0 : i32
    %c0_i32_0 = arith.constant 0 : i32
    %c0_i32_1 = arith.constant 0 : i32
    return %c0_i32, %c0_i32_0 : i32, i32
  }
  func.func @transform_16(%arg0: i32) -> (i32, i32, i32) {
    %c0_i32 = arith.constant 0 : i32
    %c0_i32_0 = arith.constant 0 : i32
    %c0_i32_1 = arith.constant 0 : i32
    return %arg0, %c0_i32, %c0_i32_0 : i32, i32, i32
  }
}

</mosaic_0001>

<llo_original>
// kernel: tpu_custom_call.1
$region0: #{tpu_custom_call.1}
  #allocation0 [shape = 'u32[]', space=smem, size = 0x4, offset = 0x4, fixed_abs, tag = 'smem constant byte address 0x4 - core index']
  #allocation1 [shape = 'u32[72,128]{1,0:T(1,128)}', space=vmem, size = 0x9000, scoped, tag = 'internal scratch']
  %s0 = inlined_call_operand.hbm [shape: bf16[2,8,32], index: 0, kind: input, shape index: {}]
  %s1 = inlined_call_operand.hbm [shape: f32[2,1,8], index: 1, kind: input, shape index: {}]
  %s2 = inlined_call_operand.vmem [shape: f32[1,32], index: 2, kind: input, shape index: {}]
  %s3 = inlined_call_operand.vmem [shape: f32[1,32], index: 3, kind: input, shape index: {}]
  %s4 = inlined_call_operand.vmem [shape: bf16[32,32], index: 4, kind: input, shape index: {}]
  %s5 = inlined_call_operand.vmem [shape: bf16[32,32], index: 5, kind: input, shape index: {}]
  %s6 = inlined_call_operand.vmem [shape: bf16[32,32], index: 6, kind: input, shape index: {}]
  %s7 = inlined_call_operand.vmem [shape: bf16[32,32], index: 7, kind: input, shape index: {}]
  %s8 = inlined_call_operand.vmem [shape: f32[1,32], index: 8, kind: input, shape index: {}]
  %s9 = inlined_call_operand.vmem [shape: f32[1,32], index: 9, kind: input, shape index: {}]
  %s10 = inlined_call_operand.vmem [shape: bf16[32,128], index: 10, kind: input, shape index: {}]
  %s11 = inlined_call_operand.vmem [shape: f32[1,128], index: 11, kind: input, shape index: {}]
  %s12 = inlined_call_operand.vmem [shape: bf16[128,32], index: 12, kind: input, shape index: {}]
  %s13 = inlined_call_operand.vmem [shape: f32[1,32], index: 13, kind: input, shape index: {}]
  %s14 = inlined_call_operand.vmem [shape: f32[1,32], index: 14, kind: input, shape index: {}]
  %s15 = inlined_call_operand.vmem [shape: f32[1,32], index: 15, kind: input, shape index: {}]
  %s16 = inlined_call_operand.hbm [shape: f32[2,1,32], index: 16, kind: output, shape index: {}]
  %s17 = sld [smem:[#allocation0]]
  $region105: #{tpu_custom_call.1} parent=0
    _
  %s19 = ssub.s32 1, %s17
  %s20 = scalar_select 0, %s19, %s17
  $region1: #{tpu_custom_call.1} parent=0
    #allocation2 [shape = 'u8[4096]{0}', space=vmem, size = 0x1000, scoped, tag = 'input window, operand 0']
    #allocation3 [shape = 's32[2]{0}', space=sflag, size = 0x8, scoped, tag = 'scoped memory for tpu_custom_call.1']
    #allocation4 [shape = 's32[2]{0}', space=sflag, size = 0x8, scoped, tag = 'scoped memory for tpu_custom_call.1']
    #allocation5 [shape = 'u8[1024]{0}', space=vmem, size = 0x400, scoped, tag = 'input window, operand 1']
    #allocation6 [shape = 's32[2]{0}', space=sflag, size = 0x8, scoped, tag = 'scoped memory for tpu_custom_call.1']
    #allocation7 [shape = 'u8[1024]{0}', space=vmem, size = 0x400, scoped, tag = 'output window, operand 0']
    %21 = vsyncpa [#allocation3], 0
    %s22 = scalar_lea.sflag [#allocation3], 1
    %23 = vsyncpa %s22, 0
    %24 = vsyncpa [#allocation6], 0
    %s25 = scalar_lea.sflag [#allocation6], 1
    %26 = vsyncpa %s25, 0
    %27 = vsyncpa [#allocation4], 0
    %s28 = scalar_lea.sflag [#allocation4], 1
    %29 = vsyncpa %s28, 0
    loop: start=0, step=1, limit=4
    $region2: #{tpu_custom_call.1} parent=1 // loop_pre_header
      _
    $region3: #{tpu_custom_call.1} parent=1 // loop_header
      %s31 = sphi 0, %s35
      %p32 = scmp.ge.s32.totalorder %s31, 4
      %s41 = sphi 0, %s43
      %s44 = sphi 0, %s41
      %s45 = sphi 0, %s44
      %s61 = sphi 0, %s45
      %s67 = sphi 0, %s69
      %s70 = sphi 0, %s67
      %s71 = sphi 0, %s70
      %s87 = sphi 0, %s71
      %s91 = sphi 0, %s91
      %s93 = sphi 0, %s91
      %s94 = sphi 0, %s93
      %s108 = sphi 0, %s94
      %s112 = sphi 0, %s112
      %s114 = sphi 0, %s112
      %s115 = sphi 0, %s114
      %s129 = sphi 0, %s115
      %s133 = sphi 0, %s133
      %s135 = sphi 0, %s133
      %s136 = sphi 0, %s135
      %s150 = sphi 0, %s136
      %s154 = sphi 0, %s154
      %s156 = sphi 0, %s154
      %s157 = sphi 0, %s156
      %s171 = sphi 0, %s157
      %s175 = sphi 0, %s175
      %s177 = sphi 0, %s175
      %s178 = sphi 0, %s177
      %s192 = sphi 0, %s178
      %s196 = sphi 0, %s196
      %s198 = sphi 0, %s196
      %s199 = sphi 0, %s198
      %s213 = sphi 0, %s199
      %s217 = sphi 0, %s217
      %s219 = sphi 0, %s217
      %s220 = sphi 0, %s219
      %s234 = sphi 0, %s220
      %s238 = sphi 0, %s238
      %s240 = sphi 0, %s238
      %s241 = sphi 0, %s240
      %s255 = sphi 0, %s241
      %s259 = sphi 0, %s259
      %s261 = sphi 0, %s259
      %s262 = sphi 0, %s261
      %s276 = sphi 0, %s262
      %s280 = sphi 0, %s280
      %s282 = sphi 0, %s280
      %s283 = sphi 0, %s282
      %s297 = sphi 0, %s283
      %s301 = sphi 0, %s301
      %s303 = sphi 0, %s301
      %s304 = sphi 0, %s303
      %s318 = sphi 0, %s304
      %s322 = sphi 0, %s322
      %s324 = sphi 0, %s322
      %s325 = sphi 0, %s324
      %s339 = sphi 0, %s325
      %s343 = sphi 0, %s343
      %s345 = sphi 0, %s343
      %s346 = sphi 0, %s345
      %s360 = sphi 0, %s346
      %s364 = sphi 0, %s364
      %s366 = sphi 0, %s364
      %s367 = sphi 0, %s366
      %s381 = sphi 0, %s367
      %s387 = sphi 0, %s389
      %s390 = sphi 0, %s387
      %s391 = sphi 0, %s390
      %s407 = sphi 0, %s391
    $region4: #{tpu_custom_call.1} parent=1 // loop_header_branch
      %34 = sbr.rel (%p32) target = $region8
    $region5: #{tpu_custom_call.1} parent=1 // loop_body
      %s36 = ssub.s32 %s31, 1
      %s37 = ssub.s32 %s31, 2
      %s38 = sadd.s32 %s31, 1
      %s39 = ssub.s32 %s31, %s38
      %p40 = scmp.eq.s32.totalorder %s39, 0
      %s42 = sadd.s32 %s41, 1
      %s43 = scalar_select %p40, %s41, %s42
      %p46 = pneg %p40
      %p47 = scmp.eq.s32.totalorder %s31, 1
      %p48 = por %p46, %p47
      %p49 = scmp.ne.s32.totalorder %s41, %s44
      %p50 = scmp.eq.s32.totalorder %s31, 0
      %p51 = por %p49, %p50
      %p52 = scmp.ne.s32.totalorder %s41, %s44
      %p53 = scmp.eq.s32.totalorder %s36, 1
      %p54 = por %p52, %p53
      %p55 = scmp.ne.s32.totalorder %s44, %s45
      %p56 = scmp.eq.s32.totalorder %s36, 0
      %p57 = por %p55, %p56
      %p58 = scmp.ne.s32.totalorder %s44, %s45
      %p59 = scmp.eq.s32.totalorder %s37, 1
      %p60 = por %p58, %p59
      %p62 = scmp.ne.s32.totalorder %s45, %s61
      %p63 = scmp.eq.s32.totalorder %s37, 0
      %p64 = por %p62, %p63
      %s65 = ssub.s32 %s31, %s38
      %p66 = scmp.eq.s32.totalorder %s65, 0
      %s68 = sadd.s32 %s67, 1
      %s69 = scalar_select %p66, %s67, %s68
      %p72 = pneg %p66
      %p73 = scmp.eq.s32.totalorder %s31, 1
      %p74 = por %p72, %p73
      %p75 = scmp.ne.s32.totalorder %s67, %s70
      %p76 = scmp.eq.s32.totalorder %s31, 0
      %p77 = por %p75, %p76
      %p78 = scmp.ne.s32.totalorder %s67, %s70
      %p79 = scmp.eq.s32.totalorder %s36, 1
      %p80 = por %p78, %p79
      %p81 = scmp.ne.s32.totalorder %s70, %s71
      %p82 = scmp.eq.s32.totalorder %s36, 0
      %p83 = por %p81, %p82
      %p84 = scmp.ne.s32.totalorder %s70, %s71
      %p85 = scmp.eq.s32.totalorder %s37, 1
      %p86 = por %p84, %p85
      %p88 = scmp.ne.s32.totalorder %s71, %s87
      %p89 = scmp.eq.s32.totalorder %s37, 0
      %p90 = por %p88, %p89
      %s92 = sadd.s32 %s91, 1
      %p95 = scmp.eq.s32.totalorder %s31, 1
      %p96 = scmp.ne.s32.totalorder %s91, %s93
      %p97 = scmp.eq.s32.totalorder %s31, 0
      %p98 = por %p96, %p97
      %p99 = scmp.ne.s32.totalorder %s91, %s93
      %p100 = scmp.eq.s32.totalorder %s36, 1
      %p101 = por %p99, %p100
      %p102 = scmp.ne.s32.totalorder %s93, %s94
      %p103 = scmp.eq.s32.totalorder %s36, 0
      %p104 = por %p102, %p103
      %p105 = scmp.ne.s32.totalorder %s93, %s94
      %p106 = scmp.eq.s32.totalorder %s37, 1
      %p107 = por %p105, %p106
      %p109 = scmp.ne.s32.totalorder %s94, %s108
      %p110 = scmp.eq.s32.totalorder %s37, 0
      %p111 = por %p109, %p110
      %s113 = sadd.s32 %s112, 1
      %p116 = scmp.eq.s32.totalorder %s31, 1
      %p117 = scmp.ne.s32.totalorder %s112, %s114
      %p118 = scmp.eq.s32.totalorder %s31, 0
      %p119 = por %p117, %p118
      %p120 = scmp.ne.s32.totalorder %s112, %s114
      %p121 = scmp.eq.s32.totalorder %s36, 1
      %p122 = por %p120, %p121
      %p123 = scmp.ne.s32.totalorder %s114, %s115
      %p124 = scmp.eq.s32.totalorder %s36, 0
      %p125 = por %p123, %p124
      %p126 = scmp.ne.s32.totalorder %s114, %s115
      %p127 = scmp.eq.s32.totalorder %s37, 1
      %p128 = por %p126, %p127
      %p130 = scmp.ne.s32.totalorder %s115, %s129
      %p131 = scmp.eq.s32.totalorder %s37, 0
      %p132 = por %p130, %p131
      %s134 = sadd.s32 %s133, 1
      %p137 = scmp.eq.s32.totalorder %s31, 1
      %p138 = scmp.ne.s32.totalorder %s133, %s135
      %p139 = scmp.eq.s32.totalorder %s31, 0
      %p140 = por %p138, %p139
      %p141 = scmp.ne.s32.totalorder %s133, %s135
      %p142 = scmp.eq.s32.totalorder %s36, 1
      %p143 = por %p141, %p142
      %p144 = scmp.ne.s32.totalorder %s135, %s136
      %p145 = scmp.eq.s32.totalorder %s36, 0
      %p146 = por %p144, %p145
      %p147 = scmp.ne.s32.totalorder %s135, %s136
      %p148 = scmp.eq.s32.totalorder %s37, 1
      %p149 = por %p147, %p148
      %p151 = scmp.ne.s32.totalorder %s136, %s150
      %p152 = scmp.eq.s32.totalorder %s37, 0
      %p153 = por %p151, %p152
      %s155 = sadd.s32 %s154, 1
      %p158 = scmp.eq.s32.totalorder %s31, 1
      %p159 = scmp.ne.s32.totalorder %s154, %s156
      %p160 = scmp.eq.s32.totalorder %s31, 0
      %p161 = por %p159, %p160
      %p162 = scmp.ne.s32.totalorder %s154, %s156
      %p163 = scmp.eq.s32.totalorder %s36, 1
      %p164 = por %p162, %p163
      %p165 = scmp.ne.s32.totalorder %s156, %s157
      %p166 = scmp.eq.s32.totalorder %s36, 0
      %p167 = por %p165, %p166
      %p168 = scmp.ne.s32.totalorder %s156, %s157
      %p169 = scmp.eq.s32.totalorder %s37, 1
      %p170 = por %p168, %p169
      %p172 = scmp.ne.s32.totalorder %s157, %s171
      %p173 = scmp.eq.s32.totalorder %s37, 0
      %p174 = por %p172, %p173
      %s176 = sadd.s32 %s175, 1
      %p179 = scmp.eq.s32.totalorder %s31, 1
      %p180 = scmp.ne.s32.totalorder %s175, %s177
      %p181 = scmp.eq.s32.totalorder %s31, 0
      %p182 = por %p180, %p181
      %p183 = scmp.ne.s32.totalorder %s175, %s177
      %p184 = scmp.eq.s32.totalorder %s36, 1
      %p185 = por %p183, %p184
      %p186 = scmp.ne.s32.totalorder %s177, %s178
      %p187 = scmp.eq.s32.totalorder %s36, 0
      %p188 = por %p186, %p187
      %p189 = scmp.ne.s32.totalorder %s177, %s178
      %p190 = scmp.eq.s32.totalorder %s37, 1
      %p191 = por %p189, %p190
      %p193 = scmp.ne.s32.totalorder %s178, %s192
      %p194 = scmp.eq.s32.totalorder %s37, 0
      %p195 = por %p193, %p194
      %s197 = sadd.s32 %s196, 1
      %p200 = scmp.eq.s32.totalorder %s31, 1
      %p201 = scmp.ne.s32.totalorder %s196, %s198
      %p202 = scmp.eq.s32.totalorder %s31, 0
      %p203 = por %p201, %p202
      %p204 = scmp.ne.s32.totalorder %s196, %s198
      %p205 = scmp.eq.s32.totalorder %s36, 1
      %p206 = por %p204, %p205
      %p207 = scmp.ne.s32.totalorder %s198, %s199
      %p208 = scmp.eq.s32.totalorder %s36, 0
      %p209 = por %p207, %p208
      %p210 = scmp.ne.s32.totalorder %s198, %s199
      %p211 = scmp.eq.s32.totalorder %s37, 1
      %p212 = por %p210, %p211
      %p214 = scmp.ne.s32.totalorder %s199, %s213
      %p215 = scmp.eq.s32.totalorder %s37, 0
      %p216 = por %p214, %p215
      %s218 = sadd.s32 %s217, 1
      %p221 = scmp.eq.s32.totalorder %s31, 1
      %p222 = scmp.ne.s32.totalorder %s217, %s219
      %p223 = scmp.eq.s32.totalorder %s31, 0
      %p224 = por %p222, %p223
      %p225 = scmp.ne.s32.totalorder %s217, %s219
      %p226 = scmp.eq.s32.totalorder %s36, 1
      %p227 = por %p225, %p226
      %p228 = scmp.ne.s32.totalorder %s219, %s220
      %p229 = scmp.eq.s32.totalorder %s36, 0
      %p230 = por %p228, %p229
      %p231 = scmp.ne.s32.totalorder %s219, %s220
      %p232 = scmp.eq.s32.totalorder %s37, 1
      %p233 = por %p231, %p232
      %p235 = scmp.ne.s32.totalorder %s220, %s234
      %p236 = scmp.eq.s32.totalorder %s37, 0
      %p237 = por %p235, %p236
      %s239 = sadd.s32 %s238, 1
      %p242 = scmp.eq.s32.totalorder %s31, 1
      %p243 = scmp.ne.s32.totalorder %s238, %s240
      %p244 = scmp.eq.s32.totalorder %s31, 0
      %p245 = por %p243, %p244
      %p246 = scmp.ne.s32.totalorder %s238, %s240
      %p247 = scmp.eq.s32.totalorder %s36, 1
      %p248 = por %p246, %p247
      %p249 = scmp.ne.s32.totalorder %s240, %s241
      %p250 = scmp.eq.s32.totalorder %s36, 0
      %p251 = por %p249, %p250
      %p252 = scmp.ne.s32.totalorder %s240, %s241
      %p253 = scmp.eq.s32.totalorder %s37, 1
      %p254 = por %p252, %p253
      %p256 = scmp.ne.s32.totalorder %s241, %s255
      %p257 = scmp.eq.s32.totalorder %s37, 0
      %p258 = por %p256, %p257
      %s260 = sadd.s32 %s259, 1
      %p263 = scmp.eq.s32.totalorder %s31, 1
      %p264 = scmp.ne.s32.totalorder %s259, %s261
      %p265 = scmp.eq.s32.totalorder %s31, 0
      %p266 = por %p264, %p265
      %p267 = scmp.ne.s32.totalorder %s259, %s261
      %p268 = scmp.eq.s32.totalorder %s36, 1
      %p269 = por %p267, %p268
      %p270 = scmp.ne.s32.totalorder %s261, %s262
      %p271 = scmp.eq.s32.totalorder %s36, 0
      %p272 = por %p270, %p271
      %p273 = scmp.ne.s32.totalorder %s261, %s262
      %p274 = scmp.eq.s32.totalorder %s37, 1
      %p275 = por %p273, %p274
      %p277 = scmp.ne.s32.totalorder %s262, %s276
      %p278 = scmp.eq.s32.totalorder %s37, 0
      %p279 = por %p277, %p278
      %s281 = sadd.s32 %s280, 1
      %p284 = scmp.eq.s32.totalorder %s31, 1
      %p285 = scmp.ne.s32.totalorder %s280, %s282
      %p286 = scmp.eq.s32.totalorder %s31, 0
      %p287 = por %p285, %p286
      %p288 = scmp.ne.s32.totalorder %s280, %s282
      %p289 = scmp.eq.s32.totalorder %s36, 1
      %p290 = por %p288, %p289
      %p291 = scmp.ne.s32.totalorder %s282, %s283
      %p292 = scmp.eq.s32.totalorder %s36, 0
      %p293 = por %p291, %p292
      %p294 = scmp.ne.s32.totalorder %s282, %s283
      %p295 = scmp.eq.s32.totalorder %s37, 1
      %p296 = por %p294, %p295
      %p298 = scmp.ne.s32.totalorder %s283, %s297
      %p299 = scmp.eq.s32.totalorder %s37, 0
      %p300 = por %p298, %p299
      %s302 = sadd.s32 %s301, 1
      %p305 = scmp.eq.s32.totalorder %s31, 1
      %p306 = scmp.ne.s32.totalorder %s301, %s303
      %p307 = scmp.eq.s32.totalorder %s31, 0
      %p308 = por %p306, %p307
      %p309 = scmp.ne.s32.totalorder %s301, %s303
      %p310 = scmp.eq.s32.totalorder %s36, 1
      %p311 = por %p309, %p310
      %p312 = scmp.ne.s32.totalorder %s303, %s304
      %p313 = scmp.eq.s32.totalorder %s36, 0
      %p314 = por %p312, %p313
      %p315 = scmp.ne.s32.totalorder %s303, %s304
      %p316 = scmp.eq.s32.totalorder %s37, 1
      %p317 = por %p315, %p316
      %p319 = scmp.ne.s32.totalorder %s304, %s318
      %p320 = scmp.eq.s32.totalorder %s37, 0
      %p321 = por %p319, %p320
      %s323 = sadd.s32 %s322, 1
      %p326 = scmp.eq.s32.totalorder %s31, 1
      %p327 = scmp.ne.s32.totalorder %s322, %s324
      %p328 = scmp.eq.s32.totalorder %s31, 0
      %p329 = por %p327, %p328
      %p330 = scmp.ne.s32.totalorder %s322, %s324
      %p331 = scmp.eq.s32.totalorder %s36, 1
      %p332 = por %p330, %p331
      %p333 = scmp.ne.s32.totalorder %s324, %s325
      %p334 = scmp.eq.s32.totalorder %s36, 0
      %p335 = por %p333, %p334
      %p336 = scmp.ne.s32.totalorder %s324, %s325
      %p337 = scmp.eq.s32.totalorder %s37, 1
      %p338 = por %p336, %p337
      %p340 = scmp.ne.s32.totalorder %s325, %s339
      %p341 = scmp.eq.s32.totalorder %s37, 0
      %p342 = por %p340, %p341
      %s344 = sadd.s32 %s343, 1
      %p347 = scmp.eq.s32.totalorder %s31, 1
      %p348 = scmp.ne.s32.totalorder %s343, %s345
      %p349 = scmp.eq.s32.totalorder %s31, 0
      %p350 = por %p348, %p349
      %p351 = scmp.ne.s32.totalorder %s343, %s345
      %p352 = scmp.eq.s32.totalorder %s36, 1
      %p353 = por %p351, %p352
      %p354 = scmp.ne.s32.totalorder %s345, %s346
      %p355 = scmp.eq.s32.totalorder %s36, 0
      %p356 = por %p354, %p355
      %p357 = scmp.ne.s32.totalorder %s345, %s346
      %p358 = scmp.eq.s32.totalorder %s37, 1
      %p359 = por %p357, %p358
      %p361 = scmp.ne.s32.totalorder %s346, %s360
      %p362 = scmp.eq.s32.totalorder %s37, 0
      %p363 = por %p361, %p362
      %s365 = sadd.s32 %s364, 1
      %p368 = scmp.eq.s32.totalorder %s31, 1
      %p369 = scmp.ne.s32.totalorder %s364, %s366
      %p370 = scmp.eq.s32.totalorder %s31, 0
      %p371 = por %p369, %p370
      %p372 = scmp.ne.s32.totalorder %s364, %s366
      %p373 = scmp.eq.s32.totalorder %s36, 1
      %p374 = por %p372, %p373
      %p375 = scmp.ne.s32.totalorder %s366, %s367
      %p376 = scmp.eq.s32.totalorder %s36, 0
      %p377 = por %p375, %p376
      %p378 = scmp.ne.s32.totalorder %s366, %s367
      %p379 = scmp.eq.s32.totalorder %s37, 1
      %p380 = por %p378, %p379
      %p382 = scmp.ne.s32.totalorder %s367, %s381
      %p383 = scmp.eq.s32.totalorder %s37, 0
      %p384 = por %p382, %p383
      %s385 = ssub.s32 %s31, %s38
      %p386 = scmp.eq.s32.totalorder %s385, 0
      %s388 = sadd.s32 %s387, 1
      %s389 = scalar_select %p386, %s387, %s388
      %p392 = pneg %p386
      %p393 = scmp.eq.s32.totalorder %s31, 1
      %p394 = por %p392, %p393
      %p395 = scmp.ne.s32.totalorder %s387, %s390
      %p396 = scmp.eq.s32.totalorder %s31, 0
      %p397 = por %p395, %p396
      %p398 = scmp.ne.s32.totalorder %s387, %s390
      %p399 = scmp.eq.s32.totalorder %s36, 1
      %p400 = por %p398, %p399
      %p401 = scmp.ne.s32.totalorder %s390, %s391
      %p402 = scmp.eq.s32.totalorder %s36, 0
      %p403 = por %p401, %p402
      %p404 = scmp.ne.s32.totalorder %s390, %s391
      %p405 = scmp.eq.s32.totalorder %s37, 1
      %p406 = por %p404, %p405
      %p408 = scmp.ne.s32.totalorder %s391, %s407
      %p409 = scmp.eq.s32.totalorder %s37, 0
      %p410 = por %p408, %p409
      %p411 = scmp.le.s32.totalorder 1, %s31
      %p412 = scmp.lt.s32.totalorder %s31, 3
      %p413 = pnand %p411, %p412
      %p414 = pneg %p413
      // Predicated region
      $region9: #{tpu_custom_call.1} parent=5 // pred_check
        _
      $region10: #{tpu_custom_call.1} parent=5 // pred_check_branch
        %416 = sbr.rel (%p413) target = $region12
      $region11: #{tpu_custom_call.1} parent=5 // pred_region
        %s417 = ssub.s32 %s31, 1
        // Predicated region
        $region13: #{tpu_custom_call.1} parent=11 // pred_check
          %p418 = pneg %p104
        $region14: #{tpu_custom_call.1} parent=11 // pred_check_branch
          %420 = sbr.rel (%p418) target = $region16
        $region15: #{tpu_custom_call.1} parent=11 // pred_region
          _
        $region16: #{tpu_custom_call.1} parent=11 // pred_fallthru
          _
        // Predicated region
        $region17: #{tpu_custom_call.1} parent=11 // pred_check
          %p421 = pneg %p125
        $region18: #{tpu_custom_call.1} parent=11 // pred_check_branch
          %423 = sbr.rel (%p421) target = $region20
        $region19: #{tpu_custom_call.1} parent=11 // pred_region
          _
        $region20: #{tpu_custom_call.1} parent=11 // pred_fallthru
          _
        // Predicated region
        $region21: #{tpu_custom_call.1} parent=11 // pred_check
          %p424 = pneg %p146
        $region22: #{tpu_custom_call.1} parent=11 // pred_check_branch
          %426 = sbr.rel (%p424) target = $region24
        $region23: #{tpu_custom_call.1} parent=11 // pred_region
          _
        $region24: #{tpu_custom_call.1} parent=11 // pred_fallthru
          _
        // Predicated region
        $region25: #{tpu_custom_call.1} parent=11 // pred_check
          %p427 = pneg %p167
        $region26: #{tpu_custom_call.1} parent=11 // pred_check_branch
          %429 = sbr.rel (%p427) target = $region28
        $region27: #{tpu_custom_call.1} parent=11 // pred_region
          _
        $region28: #{tpu_custom_call.1} parent=11 // pred_fallthru
          _
        // Predicated region
        $region29: #{tpu_custom_call.1} parent=11 // pred_check
          %p430 = pneg %p188
        $region30: #{tpu_custom_call.1} parent=11 // pred_check_branch
          %432 = sbr.rel (%p430) target = $region32
        $region31: #{tpu_custom_call.1} parent=11 // pred_region
          _
        $region32: #{tpu_custom_call.1} parent=11 // pred_fallthru
          _
        // Predicated region
        $region33: #{tpu_custom_call.1} parent=11 // pred_check
          %p433 = pneg %p209
        $region34: #{tpu_custom_call.1} parent=11 // pred_check_branch
          %435 = sbr.rel (%p433) target = $region36
        $region35: #{tpu_custom_call.1} parent=11 // pred_region
          _
        $region36: #{tpu_custom_call.1} parent=11 // pred_fallthru
          _
        // Predicated region
        $region37: #{tpu_custom_call.1} parent=11 // pred_check
          %p436 = pneg %p230
        $region38: #{tpu_custom_call.1} parent=11 // pred_check_branch
          %438 = sbr.rel (%p436) target = $region40
        $region39: #{tpu_custom_call.1} parent=11 // pred_region
          _
        $region40: #{tpu_custom_call.1} parent=11 // pred_fallthru
          _
        // Predicated region
        $region41: #{tpu_custom_call.1} parent=11 // pred_check
          %p439 = pneg %p251
        $region42: #{tpu_custom_call.1} parent=11 // pred_check_branch
          %441 = sbr.rel (%p439) target = $region44
        $region43: #{tpu_custom_call.1} parent=11 // pred_region
          _
        $region44: #{tpu_custom_call.1} parent=11 // pred_fallthru
          _
        // Predicated region
        $region45: #{tpu_custom_call.1} parent=11 // pred_check
          %p442 = pneg %p272
        $region46: #{tpu_custom_call.1} parent=11 // pred_check_branch
          %444 = sbr.rel (%p442) target = $region48
        $region47: #{tpu_custom_call.1} parent=11 // pred_region
          _
        $region48: #{tpu_custom_call.1} parent=11 // pred_fallthru
          _
        // Predicated region
        $region49: #{tpu_custom_call.1} parent=11 // pred_check
          %p445 = pneg %p293
        $region50: #{tpu_custom_call.1} parent=11 // pred_check_branch
          %447 = sbr.rel (%p445) target = $region52
        $region51: #{tpu_custom_call.1} parent=11 // pred_region
          _
        $region52: #{tpu_custom_call.1} parent=11 // pred_fallthru
          _
        // Predicated region
        $region53: #{tpu_custom_call.1} parent=11 // pred_check
          %p448 = pneg %p314
        $region54: #{tpu_custom_call.1} parent=11 // pred_check_branch
          %450 = sbr.rel (%p448) target = $region56
        $region55: #{tpu_custom_call.1} parent=11 // pred_region
          _
        $region56: #{tpu_custom_call.1} parent=11 // pred_fallthru
          _
        // Predicated region
        $region57: #{tpu_custom_call.1} parent=11 // pred_check
          %p451 = pneg %p335
        $region58: #{tpu_custom_call.1} parent=11 // pred_check_branch
          %453 = sbr.rel (%p451) target = $region60
        $region59: #{tpu_custom_call.1} parent=11 // pred_region
          _
        $region60: #{tpu_custom_call.1} parent=11 // pred_fallthru
          _
        // Predicated region
        $region61: #{tpu_custom_call.1} parent=11 // pred_check
          %p454 = pneg %p356
        $region62: #{tpu_custom_call.1} parent=11 // pred_check_branch
          %456 = sbr.rel (%p454) target = $region64
        $region63: #{tpu_custom_call.1} parent=11 // pred_region
          _
        $region64: #{tpu_custom_call.1} parent=11 // pred_fallthru
          _
        // Predicated region
        $region65: #{tpu_custom_call.1} parent=11 // pred_check
          %p457 = pneg %p377
        $region66: #{tpu_custom_call.1} parent=11 // pred_check_branch
          %459 = sbr.rel (%p457) target = $region68
        $region67: #{tpu_custom_call.1} parent=11 // pred_region
          _
        $region68: #{tpu_custom_call.1} parent=11 // pred_fallthru
          _
      $region12: #{tpu_custom_call.1} parent=5 // pred_fallthru
        _
      %p460 = scmp.lt.s32.totalorder %s31, 2
      // Predicated region
      $region69: #{tpu_custom_call.1} parent=5 // pred_check
        %p461 = pneg %p460
      $region70: #{tpu_custom_call.1} parent=5 // pred_check_branch
        %463 = sbr.rel (%p461) target = $region72
      $region71: #{tpu_custom_call.1} parent=5 // pred_region
        // Predicated region
        $region73: #{tpu_custom_call.1} parent=71 // pred_check
          %p464 = pneg %p51
        $region74: #{tpu_custom_call.1} parent=71 // pred_check_branch
          %466 = sbr.rel (%p464) target = $region76
        $region75: #{tpu_custom_call.1} parent=71 // pred_region
          %s467 = sand.u32 %s41, 1
          %s468 = scalar_lea.sflag [#allocation3], %s467
          %s469 = sand.u32 %s41, 1
          %s470 = smul.addr %s469, 4
          %s471 = scalar_lea.vmem [#allocation2], %s470
          %473 = vsyncadd %s468, 0
          %s474 = smul.addr %s31, 4
          %s475 = scalar_lea.hbm %s0, %s474
          %s477 = sshll.u32 %s475, 4
          %s478 = int_to_ptr.hbm [resolvable:$true] %s477
          %s479 = sshll.u32 %s471, 4
          %s480 = int_to_ptr.vmem [resolvable:$true] %s479
          %482 = dma.hbm_to_vmem [thread:$0]  %s478, 64, %s480, %s468
        $region76: #{tpu_custom_call.1} parent=71 // pred_fallthru
          _
        // Predicated region
        $region77: #{tpu_custom_call.1} parent=71 // pred_check
          %p483 = pneg %p77
        $region78: #{tpu_custom_call.1} parent=71 // pred_check_branch
          %485 = sbr.rel (%p483) target = $region80
        $region79: #{tpu_custom_call.1} parent=71 // pred_region
          %s486 = sand.u32 %s67, 1
          %s487 = scalar_lea.sflag [#allocation6], %s486
          %s488 = sand.u32 %s67, 1
          %s489 = scalar_lea.vmem [#allocation5], %s488
          %491 = vsyncadd %s487, 0
          %s492 = scalar_lea.hbm %s1, %s31
          %s494 = sshll.u32 %s492, 4
          %s495 = int_to_ptr.hbm [resolvable:$true] %s494
          %s496 = sshll.u32 %s489, 4
          %s497 = int_to_ptr.vmem [resolvable:$true] %s496
          %499 = dma.hbm_to_vmem [thread:$0]  %s495, 16, %s497, %s487
        $region80: #{tpu_custom_call.1} parent=71 // pred_fallthru
          _
      $region72: #{tpu_custom_call.1} parent=5 // pred_fallthru
        _
      %p500 = scmp.le.s32.totalorder 1, %s31
      %p501 = scmp.lt.s32.totalorder %s31, 3
      %p502 = pnand %p500, %p501
      %p503 = pneg %p502
      // Predicated region
      $region81: #{tpu_custom_call.1} parent=5 // pred_check
        _
      $region82: #{tpu_custom_call.1} parent=5 // pred_check_branch
        %505 = sbr.rel (%p502) target = $region84
      $region83: #{tpu_custom_call.1} parent=5 // pred_region
        %s506 = ssub.s32 %s31, 1
        %s507 = sand.u32 %s44, 1
        %s508 = scalar_lea.sflag [#allocation3], %s507
        %s509 = sand.u32 %s44, 1
        %s510 = smul.addr %s509, 4
        %s511 = scalar_lea.vmem [#allocation2], %s510
        // Predicated region
        $region85: #{tpu_custom_call.1} parent=83 // pred_check
          %p512 = pneg %p57
        $region86: #{tpu_custom_call.1} parent=83 // pred_check_branch
          %514 = sbr.rel (%p512) target = $region88
        $region87: #{tpu_custom_call.1} parent=83 // pred_region
          %516 = dma.done %s508, 64
        $region88: #{tpu_custom_call.1} parent=83 // pred_fallthru
          _
        %s517 = sand.u32 %s70, 1
        %s518 = scalar_lea.sflag [#allocation6], %s517
        %s519 = sand.u32 %s70, 1
        %s520 = scalar_lea.vmem [#allocation5], %s519
        // Predicated region
        $region89: #{tpu_custom_call.1} parent=83 // pred_check
          %p521 = pneg %p83
        $region90: #{tpu_custom_call.1} parent=83 // pred_check_branch
          %523 = sbr.rel (%p521) target = $region92
        $region91: #{tpu_custom_call.1} parent=83 // pred_region
          %525 = dma.done %s518, 16
        $region92: #{tpu_custom_call.1} parent=83 // pred_fallthru
          _
        %s526 = sand.u32 %s44, 1
        %s527 = scalar_lea.sflag [#allocation3], %s526
        %s528 = sand.u32 %s44, 1
        %s529 = smul.addr %s528, 4
        %s530 = scalar_lea.vmem [#allocation2], %s529
        %p531 = pneg %p57
        %p532 = pneg %p54
        %s533 = sand.u32 %s70, 1
        %s534 = scalar_lea.sflag [#allocation6], %s533
        %s535 = sand.u32 %s70, 1
        %s536 = scalar_lea.vmem [#allocation5], %s535
        %p537 = pneg %p83
        %p538 = pneg %p80
        %p539 = pneg %p104
        %p540 = pneg %p101
        %p541 = pneg %p125
        %p542 = pneg %p122
        %p543 = pneg %p146
        %p544 = pneg %p143
        %p545 = pneg %p167
        %p546 = pneg %p164
        %p547 = pneg %p188
        %p548 = pneg %p185
        %p549 = pneg %p209
        %p550 = pneg %p206
        %p551 = pneg %p230
        %p552 = pneg %p227
        %p553 = pneg %p251
        %p554 = pneg %p248
        %p555 = pneg %p272
        %p556 = pneg %p269
        %p557 = pneg %p293
        %p558 = pneg %p290
        %p559 = pneg %p314
        %p560 = pneg %p311
        %p561 = pneg %p335
        %p562 = pneg %p332
        %p563 = pneg %p356
        %p564 = pneg %p353
        %p565 = pneg %p377
        %p566 = pneg %p374
        %p567 = pneg %p403
        %p568 = pneg %p400
        %s569 = sand.u32 %s390, 1
        %s570 = scalar_lea.sflag [#allocation4], %s569
        %s571 = sand.u32 %s390, 1
        %s572 = scalar_lea.vmem [#allocation7], %s571
        %v574 = vld [vmem:[%s511] sm:$0xf]
        %v575 = vunpack.c.l.bf16 %v574
        %v576 = vld [vmem:[%s2] sm:$0x1]
        %v577 = vld [vmem:[%s3] sm:$0x1]
        %vm578 = vcmask 261120
        %v579 = vsel %vm578, %v575, 0.0
        %580 = vadd.xlane.f32.xlu0 %v579
        %v581 = vpop.xlane.xlu0 %580
        %v582 = vrcp.pop 32.0
        %v583 = vmul.f32 32.0, %v582
        %v584 = vsub.f32 1.0, %v583
        %v585 = vmul.f32 %v582, %v584
        %v586 = vadd.f32 %v582, %v585
        %vm587 = vweird.f32 %v582
        %v588 = vsel %vm587, %v582, %v586
        %v589 = vmul.f32 %v581, %v588
        %v590 = vsub.f32 %v575, %v589
        %v591 = vmul.f32 %v590, %v590
        %v592 = vsel %vm578, %v591, 0.0
        %593 = vadd.xlane.f32.xlu0 %v592
        %v594 = vpop.xlane.xlu0 %593
        %v595 = vmul.f32 %v594, %v588
        %v596 = vadd.f32 %v595, 1e-05
        %v597 = vrsqrt.pop %v596
        %v598 = vmul.f32 %v597, %v596
        %v599 = vmul.f32 %v598, %v597
        %v600 = vmul.f32 0.5, %v599
        %v601 = vsub.f32 1.5, %v600
        %v602 = vmul.f32 %v597, %v601
        %vm603 = vweird.f32 %v596
        %vm604 = vweird.f32 %v597
        %vm605 = vmor %vm603, %vm604
        %v606 = vsel %vm605, %v597, %v602
        %v607 = vmul.f32 %v590, %v606
        %v609 = vperm.slane %v576, 0
        %v611 = vmul.f32 %v607, %v609
        %v613 = vperm.slane %v577, 0
        %v615 = vadd.f32 %v611, %v613
        %v616 = vpack.c.bf16 %v615, %v615
        %v617 = vld [vmem:[%s5] sm:$0xf]
        %v618 = vld [vmem:[%s5 + $0x4] sm:$0xf]
        %v619 = vld [vmem:[%s5 + $0x8] sm:$0xf]
        %v620 = vld [vmem:[%s5 + $0xc] sm:$0xf]
        %v625 = vunpack.c.l.b16 %v617
        %v626 = vunpack.c.l.b16 %v618
        %v627 = vunpack.c.l.b16 %v619
        %v628 = vunpack.c.l.b16 %v620
        %v629 = vpack.c.b16 %v626, %v625
        %v630 = vpack.c.b16 %v628, %v627
        %v634 = vsel %vm578, %v616, 0
        %636 = vmatpush.bf16.msra.mxu0 0
        %637 = vmatpush.bf16.msra.mxu0 0
        %638 = vmatpush.bf16.msra.mxu0 0
        %639 = vmatpush.bf16.msra.mxu0 0
        %640 = vmatpush.bf16.msra.mxu0 0
        %641 = vmatpush.bf16.msra.mxu0 0
        %642 = vmatpush.bf16.msra.mxu0 %v630
        %643 = vmatpush.bf16.msra.mxu0 %v629
        %644 = vmatmul.bf16.gmra.mxu0 %v634
        %v645 = vpop.f32.mrf.mxu0
        %v646 = vadd.f32 0.0, %v645
        %v647 = vpop.f32.mrf.mxu0
        %648 = vdwg.mxu0
        %v649 = vld [vmem:[%s6] sm:$0xf]
        %v650 = vld [vmem:[%s6 + $0x4] sm:$0xf]
        %v651 = vld [vmem:[%s6 + $0x8] sm:$0xf]
        %v652 = vld [vmem:[%s6 + $0xc] sm:$0xf]
        %v657 = vunpack.c.l.b16 %v649
        %v658 = vunpack.c.l.b16 %v650
        %v659 = vunpack.c.l.b16 %v651
        %v660 = vunpack.c.l.b16 %v652
        %v661 = vpack.c.b16 %v658, %v657
        %v662 = vpack.c.b16 %v660, %v659
        %665 = vmatpush.bf16.msra.mxu0 0
        %666 = vmatpush.bf16.msra.mxu0 0
        %667 = vmatpush.bf16.msra.mxu0 0
        %668 = vmatpush.bf16.msra.mxu0 0
        %669 = vmatpush.bf16.msra.mxu0 0
        %670 = vmatpush.bf16.msra.mxu0 0
        %671 = vmatpush.bf16.msra.mxu0 %v662
        %672 = vmatpush.bf16.msra.mxu0 %v661
        %673 = vmatmul.bf16.gmra.mxu0 %v634
        %v674 = vpop.f32.mrf.mxu0
        %v675 = vadd.f32 0.0, %v674
        %v676 = vpop.f32.mrf.mxu0
        %677 = vdwg.mxu0
        %v678 = vld [vmem:[%s4] sm:$0xf]
        %v679 = vld [vmem:[%s4 + $0x4] sm:$0xf]
        %v680 = vld [vmem:[%s4 + $0x8] sm:$0xf]
        %v681 = vld [vmem:[%s4 + $0xc] sm:$0xf]
        %v682 = vshrl.u32 %v616, 16
        %v684 = vrot.slane %v682, 3
        %v689 = vunpack.c.l.b16 %v678
        %v690 = vunpack.c.l.b16 %v679
        %v691 = vunpack.c.l.b16 %v680
        %v692 = vunpack.c.l.b16 %v681
        %v693 = vpack.c.b16 %v690, %v689
        %v694 = vpack.c.b16 %v692, %v691
        %v698 = vsel %vm578, %v684, 0
        %700 = vmatpush.bf16.msra.mxu0 0
        %701 = vmatpush.bf16.msra.mxu0 0
        %702 = vmatpush.bf16.msra.mxu0 0
        %703 = vmatpush.bf16.msra.mxu0 0
        %704 = vmatpush.bf16.msra.mxu0 0
        %705 = vmatpush.bf16.msra.mxu0 0
        %706 = vmatpush.bf16.msra.mxu0 %v694
        %707 = vmatpush.bf16.msra.mxu0 %v693
        %708 = vmatmul.bf16.gmra.mxu0 %v698
        %v709 = vpop.f32.mrf.mxu0
        %v710 = vadd.f32 0.0, %v709
        %v711 = vpop.f32.mrf.mxu0
        %712 = vdwg.mxu0
        %v713 = vpack.c.bf16 %v710, %v710
        %v714 = vpack.c.bf16 %v646, %v646
        %v715 = vld [vmem:[%s520] sm:$0x1]
        %vm716 = vcmp.gt.f32.partialorder %v715, 0.5
        %v717 = vsel %vm716, 0.0, -1e+09
        %v719 = vsel %vm578, %v713, 0
        %v722 = vsel %vm578, %v714, 0
        %724 = vmatpush.bf16.xpose.msra.mxu0 0
        %725 = vmatpush.bf16.xpose.msra.mxu0 0
        %726 = vmatpush.bf16.xpose.msra.mxu0 0
        %727 = vmatpush.bf16.xpose.msra.mxu0 0
        %728 = vmatpush.bf16.xpose.msra.mxu0 0
        %729 = vmatpush.bf16.xpose.msra.mxu0 0
        %730 = vmatpush.bf16.xpose.msra.mxu0 0
        %731 = vmatpush.bf16.xpose.msra.mxu0 %v722
        %732 = vmatmul.bf16.gmra.mxu0 %v719
        %v733 = vpop.f32.mrf.mxu0
        %v734 = vadd.f32 %v717, %v733
        %v735 = vpop.f32.mrf.mxu0
        %736 = vdwg.mxu0
        %vm737 = vcmask 57344
        %v738 = vsel %vm737, %v734, -inf
        %739 = vmax.xlane.f32.xlu0 %v738
        %v740 = vpop.xlane.xlu0 %739
        %v741 = vsub.f32 %v734, %v740
        %v742 = vmul.f32 %v741, 1.442695
        %v743 = vpow.pop %v742
        %v744 = vsel %vm737, %v743, 0.0
        %745 = vadd.xlane.f32.xlu0 %v744
        %v746 = vpop.xlane.xlu0 %745
        %v747 = vrcp.pop %v746
        %v748 = vmul.f32 %v743, %v747
        %v749 = vpack.c.bf16 %v748, %v748
        %v750 = vpack.c.bf16 %v675, %v675
        %vm751 = vcmask 64512
        %v753 = vsel %vm751, %v749, 0
        %vm755 = vcmask 1043456
        %v757 = vsel %vm755, %v750, 0
        %759 = vmatpush.bf16.msra.mxu0 0
        %760 = vmatpush.bf16.msra.mxu0 0
        %761 = vmatpush.bf16.msra.mxu0 0
        %762 = vmatpush.bf16.msra.mxu0 0
        %763 = vmatpush.bf16.msra.mxu0 0
        %764 = vmatpush.bf16.msra.mxu0 0
        %765 = vmatpush.bf16.msra.mxu0 0
        %766 = vmatpush.bf16.msra.mxu0 %v757
        %767 = vmatmul.bf16.gmra.mxu0 %v753
        %v768 = vpop.f32.mrf.mxu0
        %v769 = vadd.f32 0.0, %v768
        %v770 = vpop.f32.mrf.mxu0
        %771 = vdwg.mxu0
        %v772 = vpack.c.bf16 %v769, %v769
        %v773 = vld [vmem:[%s7] sm:$0xf]
        %v774 = vld [vmem:[%s7 + $0x4] sm:$0xf]
        %v775 = vld [vmem:[%s7 + $0x8] sm:$0xf]
        %v776 = vld [vmem:[%s7 + $0xc] sm:$0xf]
        %v781 = vunpack.c.l.b16 %v773
        %v782 = vunpack.c.l.b16 %v774
        %v783 = vunpack.c.l.b16 %v775
        %v784 = vunpack.c.l.b16 %v776
        %v785 = vpack.c.b16 %v782, %v781
        %v786 = vpack.c.b16 %v784, %v783
        %v790 = vsel %vm578, %v772, 0
        %792 = vmatpush.bf16.msra.mxu0 0
        %793 = vmatpush.bf16.msra.mxu0 0
        %794 = vmatpush.bf16.msra.mxu0 0
        %795 = vmatpush.bf16.msra.mxu0 0
        %796 = vmatpush.bf16.msra.mxu0 0
        %797 = vmatpush.bf16.msra.mxu0 0
        %798 = vmatpush.bf16.msra.mxu0 %v786
        %799 = vmatpush.bf16.msra.mxu0 %v785
        %800 = vmatmul.bf16.gmra.mxu0 %v790
        %v801 = vpop.f32.mrf.mxu0
        %v802 = vadd.f32 0.0, %v801
        %v803 = vpop.f32.mrf.mxu0
        %804 = vdwg.mxu0
        %v806 = vrot.slane %v802, 1
        %v808 = vadd.f32 %v575, %v806
        %v809 = vld [vmem:[%s8] sm:$0x1]
        %v810 = vld [vmem:[%s9] sm:$0x1]
        %vm811 = vcmask 261127
        %v812 = vsel %vm811, %v808, 0.0
        %813 = vadd.xlane.f32.xlu0 %v812
        %v814 = vpop.xlane.xlu0 %813
        %v815 = vmul.f32 %v814, %v588
        %v816 = vsub.f32 %v808, %v815
        %v817 = vmul.f32 %v816, %v816
        %v818 = vsel %vm811, %v817, 0.0
        %819 = vadd.xlane.f32.xlu0 %v818
        %v820 = vpop.xlane.xlu0 %819
        %v821 = vmul.f32 %v820, %v588
        %v822 = vadd.f32 %v821, 1e-05
        %v823 = vrsqrt.pop %v822
        %v824 = vmul.f32 %v823, %v822
        %v825 = vmul.f32 %v824, %v823
        %v826 = vmul.f32 0.5, %v825
        %v827 = vsub.f32 1.5, %v826
        %v828 = vmul.f32 %v823, %v827
        %vm829 = vweird.f32 %v822
        %vm830 = vweird.f32 %v823
        %vm831 = vmor %vm829, %vm830
        %v832 = vsel %vm831, %v823, %v828
        %v833 = vmul.f32 %v816, %v832
        %v835 = vperm.slane %v809, 0
        %v837 = vmul.f32 %v833, %v835
        %v839 = vperm.slane %v810, 0
        %v841 = vadd.f32 %v837, %v839
        %v842 = vpack.c.bf16 %v841, %v841
        %v843 = vld [vmem:[%s10] sm:$0xf]
        %v844 = vld [vmem:[%s10 + $0x4] sm:$0xf]
        %v845 = vld [vmem:[%s10 + $0x8] sm:$0xf]
        %v846 = vld [vmem:[%s10 + $0xc] sm:$0xf]
        %v847 = vld [vmem:[%s11] sm:$0x1]
        %v849 = vshrl.u32 %v842, 16
        %v851 = vrot.slane %v849, 3
        %v856 = vunpack.c.l.b16 %v843
        %v857 = vunpack.c.l.b16 %v844
        %v858 = vunpack.c.l.b16 %v845
        %v859 = vunpack.c.l.b16 %v846
        %v860 = vpack.c.b16 %v857, %v856
        %v861 = vpack.c.b16 %v859, %v858
        %v865 = vsel %vm578, %v851, 0
        %867 = vmatpush.bf16.msra.mxu0 0
        %868 = vmatpush.bf16.msra.mxu0 0
        %869 = vmatpush.bf16.msra.mxu0 0
        %870 = vmatpush.bf16.msra.mxu0 0
        %871 = vmatpush.bf16.msra.mxu0 0
        %872 = vmatpush.bf16.msra.mxu0 0
        %873 = vmatpush.bf16.msra.mxu0 %v861
        %874 = vmatpush.bf16.msra.mxu0 %v860
        %875 = vmatmul.bf16.gmra.mxu0 %v865
        %v876 = vpop.f32.mrf.mxu0
        %v877 = vadd.f32 %v847, %v876
        %v878 = vpop.f32.mrf.mxu0
        %879 = vdwg.mxu0
        %v880 = vmul.f32 %v877, %v877
        %v881 = vmul.f32 %v877, %v880
        %v882 = vmul.f32 %v881, 0.044715
        %v883 = vadd.f32 %v877, %v882
        %v884 = vmul.f32 %v883, 0.7978846
        %v885 = vtanh.pop %v884
        %v886 = vadd.f32 %v885, 1.0
        %v887 = vmul.f32 %v886, 0.5
        %v888 = vmul.f32 %v877, %v887
        %v889 = vpack.c.bf16 %v888, %v888
        %v890 = vld [vmem:[%s12] sm:$0xf]
        %v891 = vld [vmem:[%s12 + $0x4] sm:$0xf]
        %v892 = vld [vmem:[%s12 + $0x8] sm:$0xf]
        %v893 = vld [vmem:[%s12 + $0xc] sm:$0xf]
        %v894 = vld [vmem:[%s12 + $0x10] sm:$0xf]
        %v895 = vld [vmem:[%s12 + $0x14] sm:$0xf]
        %v896 = vld [vmem:[%s12 + $0x18] sm:$0xf]
        %v897 = vld [vmem:[%s12 + $0x1c] sm:$0xf]
        %v898 = vld [vmem:[%s12 + $0x20] sm:$0xf]
        %v899 = vld [vmem:[%s12 + $0x24] sm:$0xf]
        %v900 = vld [vmem:[%s12 + $0x28] sm:$0xf]
        %v901 = vld [vmem:[%s12 + $0x2c] sm:$0xf]
        %v902 = vld [vmem:[%s12 + $0x30] sm:$0xf]
        %v903 = vld [vmem:[%s12 + $0x34] sm:$0xf]
        %v904 = vld [vmem:[%s12 + $0x38] sm:$0xf]
        %v905 = vld [vmem:[%s12 + $0x3c] sm:$0xf]
        %v906 = vld [vmem:[%s13] sm:$0x1]
        %v923 = vunpack.c.l.b16 %v890
        %v924 = vunpack.c.l.b16 %v891
        %v925 = vunpack.c.l.b16 %v892
        %v926 = vunpack.c.l.b16 %v893
        %v927 = vunpack.c.l.b16 %v894
        %v928 = vunpack.c.l.b16 %v895
        %v929 = vunpack.c.l.b16 %v896
        %v930 = vunpack.c.l.b16 %v897
        %v931 = vunpack.c.l.b16 %v898
        %v932 = vunpack.c.l.b16 %v899
        %v933 = vunpack.c.l.b16 %v900
        %v934 = vunpack.c.l.b16 %v901
        %v935 = vunpack.c.l.b16 %v902
        %v936 = vunpack.c.l.b16 %v903
        %v937 = vunpack.c.l.b16 %v904
        %v938 = vunpack.c.l.b16 %v905
        %v939 = vpack.c.b16 %v924, %v923
        %v940 = vpack.c.b16 %v926, %v925
        %v941 = vpack.c.b16 %v928, %v927
        %v942 = vpack.c.b16 %v930, %v929
        %v943 = vpack.c.b16 %v932, %v931
        %v944 = vpack.c.b16 %v934, %v933
        %v945 = vpack.c.b16 %v936, %v935
        %v946 = vpack.c.b16 %v938, %v937
        %955 = vmatpush.bf16.msra.mxu0 %v946
        %956 = vmatpush.bf16.msra.mxu0 %v945
        %957 = vmatpush.bf16.msra.mxu0 %v944
        %958 = vmatpush.bf16.msra.mxu0 %v943
        %959 = vmatpush.bf16.msra.mxu0 %v942
        %960 = vmatpush.bf16.msra.mxu0 %v941
        %961 = vmatpush.bf16.msra.mxu0 %v940
        %962 = vmatpush.bf16.msra.mxu0 %v939
        %963 = vmatmul.bf16.gmra.mxu0 %v889
        %v964 = vpop.f32.mrf.mxu0
        %v965 = vadd.f32 %v906, %v964
        %v966 = vpop.f32.mrf.mxu0
        %967 = vdwg.mxu0
        %v969 = vrot.slane %v965, 1
        %v971 = vadd.f32 %v808, %v969
        %v972 = vld [vmem:[%s14] sm:$0x1]
        %v973 = vld [vmem:[%s15] sm:$0x1]
        %v974 = vsel %vm811, %v971, 0.0
        %975 = vadd.xlane.f32.xlu0 %v974
        %v976 = vpop.xlane.xlu0 %975
        %v977 = vmul.f32 %v976, %v588
        %v978 = vsub.f32 %v971, %v977
        %v979 = vmul.f32 %v978, %v978
        %v980 = vsel %vm811, %v979, 0.0
        %981 = vadd.xlane.f32.xlu0 %v980
        %v982 = vpop.xlane.xlu0 %981
        %v983 = vmul.f32 %v982, %v588
        %v984 = vadd.f32 %v983, 1e-05
        %v985 = vrsqrt.pop %v984
        %v986 = vmul.f32 %v985, %v984
        %v987 = vmul.f32 %v986, %v985
        %v988 = vmul.f32 0.5, %v987
        %v989 = vsub.f32 1.5, %v988
        %v990 = vmul.f32 %v985, %v989
        %vm991 = vweird.f32 %v984
        %vm992 = vweird.f32 %v985
        %vm993 = vmor %vm991, %vm992
        %v994 = vsel %vm993, %v985, %v990
        %v995 = vmul.f32 %v978, %v994
        %v997 = vperm.slane %v972, 0
        %v999 = vmul.f32 %v995, %v997
        %v1001 = vperm.slane %v973, 0
        %v1003 = vadd.f32 %v999, %v1001
        %1004 = vst.msk [vmem:[%s572 - $0x7] sm:$0x80] %vm811, %v1003
        %s1005 = sand.u32 %s390, 1
        %s1006 = scalar_lea.sflag [#allocation4], %s1005
        %s1007 = sand.u32 %s390, 1
        %s1008 = scalar_lea.vmem [#allocation7], %s1007
        // Predicated region
        $region93: #{tpu_custom_call.1} parent=83 // pred_check
          %p1009 = pneg %p400
        $region94: #{tpu_custom_call.1} parent=83 // pred_check_branch
          %1011 = sbr.rel (%p1009) target = $region96
        $region95: #{tpu_custom_call.1} parent=83 // pred_region
          %1013 = vsyncadd %s1006, 0
          %s1014 = scalar_lea.hbm %s16, %s36
          %s1016 = sshll.u32 %s1008, 4
          %s1017 = int_to_ptr.vmem [resolvable:$true] %s1016
          %s1018 = sshll.u32 %s1014, 4
          %s1019 = int_to_ptr.hbm [resolvable:$true] %s1018
          %1021 = dma.vmem_to_hbm [thread:$0]  %s1017, 16, %s1019, %s1006
        $region96: #{tpu_custom_call.1} parent=83 // pred_fallthru
          _
      $region84: #{tpu_custom_call.1} parent=5 // pred_fallthru
        _
      %p1022 = scmp.le.s32.totalorder 2, %s31
      // Predicated region
      $region97: #{tpu_custom_call.1} parent=5 // pred_check
        %p1023 = pneg %p1022
      $region98: #{tpu_custom_call.1} parent=5 // pred_check_branch
        %1025 = sbr.rel (%p1023) target = $region100
      $region99: #{tpu_custom_call.1} parent=5 // pred_region
        %s1026 = ssub.s32 %s31, 2
        // Predicated region
        $region101: #{tpu_custom_call.1} parent=99 // pred_check
          %p1027 = pneg %p406
        $region102: #{tpu_custom_call.1} parent=99 // pred_check_branch
          %1029 = sbr.rel (%p1027) target = $region104
        $region103: #{tpu_custom_call.1} parent=99 // pred_region
          %s1030 = sand.u32 %s391, 1
          %s1031 = scalar_lea.sflag [#allocation4], %s1030
          %s1032 = sand.u32 %s391, 1
          %s1033 = scalar_lea.vmem [#allocation7], %s1032
          %1035 = dma.done %s1031, 16
        $region104: #{tpu_custom_call.1} parent=99 // pred_fallthru
          _
      $region100: #{tpu_custom_call.1} parent=5 // pred_fallthru
        _
    $region6: #{tpu_custom_call.1} parent=1 // loop_footer
      %s35 = sadd.s32 1, %s31
    $region7: #{tpu_custom_call.1} parent=1 // loop_footer_branch
      %30 = sbr.rel target = $region3
    $region8: #{tpu_custom_call.1} parent=1 // loop_exit
      _
    %1036 = vsyncpa [#allocation3], 1
    %s1037 = scalar_lea.sflag [#allocation3], 1
    %1038 = vsyncpa %s1037, 1
    %1039 = vsyncpa [#allocation6], 1
    %s1040 = scalar_lea.sflag [#allocation6], 1
    %1041 = vsyncpa %s1040, 1
    %1042 = vsyncpa [#allocation4], 1
    %s1043 = scalar_lea.sflag [#allocation4], 1
    %1044 = vsyncpa %s1043, 1

</llo_original>
